<compile_context>
chip_gen: v7x
topology: tpu7x:2x2x1
jax: 0.10.0
libtpu: 0.0.40
codegen_flags: <defaults>
</compile_context>

<pallas_src>
import jax
import jax.numpy as jnp
from jax.experimental import pallas as pl
from jax.experimental.pallas import tpu as pltpu

_LANE = 128
_SUBLANE = 8
_BLOCK_BYTES = 2 * 1024 * 1024      # target bytes per operand block
_MAX_TILE_ROWS = 1024               # keeps the (tile_rows, 2) alpha block small
_VMEM_LIMIT = 32 * 1024 * 1024      # safe on v5e/v6e/v7x physical VMEM
_MIN_PALLAS_ELEMS = 256             # below this the fused XLA op wins anyway


def _round_up(x, m):
    return -(-x // m) * m


def _cprelu_kernel(alpha_ref, re_ref, im_ref, ore_ref, oim_ref):
    """Per-row PReLU applied to both planes.

    alpha_ref: (tile_rows, 2) f32 -> per-row (alpha_real, alpha_imag).
    re/im/ore/oim: (tile_rows, tile_lanes) f32.
    """
    a = alpha_ref[...]
    a_re = a[:, 0:1]
    a_im = a[:, 1:2]
    re = re_ref[...]
    im = im_ref[...]
    ore_ref[...] = jnp.where(re >= 0.0, re, a_re * re)
    oim_ref[...] = jnp.where(im >= 0.0, im, a_im * im)


def _choose_tiling(n_rows, lanes):
    """Pick (tile_rows, rows_pad, tile_lanes, lanes_pad, grid)."""
    lanes_p = _round_up(lanes, _LANE)

    # Lane tile: multiple of 128, capped so an 8-row block stays <= ~2 MiB.
    max_tile_lanes = max(_LANE, (_BLOCK_BYTES // (_SUBLANE * 4)) // _LANE * _LANE)
    tile_lanes = min(lanes_p, max_tile_lanes)
    lanes_pad = _round_up(lanes_p, tile_lanes)

    # Row tile: multiple of 8, block <= ~2 MiB, <= 1024 rows.
    row_bytes = tile_lanes * 4
    max_tile_rows = max(_SUBLANE,
                        min(_MAX_TILE_ROWS,
                            (_BLOCK_BYTES // row_bytes) // _SUBLANE * _SUBLANE))
    tile_rows = min(_round_up(n_rows, _SUBLANE), max_tile_rows)
    rows_pad = _round_up(n_rows, tile_rows)

    # Prefer >= 4 grid steps (>= 2 per TensorCore on v7x) when there is enough
    # data to make software pipelining / megacore sharding worthwhile.
    steps = (rows_pad // tile_rows) * (lanes_pad // tile_lanes)
    if (steps < 4 and rows_pad * lanes_pad * 4 > 2 * _BLOCK_BYTES
            and rows_pad >= 4 * _SUBLANE):
        tile_rows = _round_up(-(-rows_pad // 4), _SUBLANE)
        rows_pad = _round_up(n_rows, tile_rows)

    grid = (rows_pad // tile_rows, lanes_pad // tile_lanes)
    return tile_rows, rows_pad, tile_lanes, lanes_pad, grid


def _cprelu_planar_pallas_2d(re2, im2, alpha_rows, n_rows, lanes):
    """re2/im2: (n_rows, lanes) f32 planes; alpha_rows: (n_rows, 2) f32."""
    tile_rows, rows_pad, tile_lanes, lanes_pad, grid = _choose_tiling(n_rows, lanes)

    if rows_pad != n_rows or lanes_pad != lanes:
        pad = ((0, rows_pad - n_rows), (0, lanes_pad - lanes))
        re2 = jnp.pad(re2, pad)
        im2 = jnp.pad(im2, pad)
    if rows_pad != n_rows:
        alpha_rows = jnp.pad(alpha_rows, ((0, rows_pad - n_rows), (0, 0)))

    out_sds = jax.ShapeDtypeStruct((rows_pad, lanes_pad), jnp.float32)
    plane_spec = pl.BlockSpec((tile_rows, tile_lanes), lambda i, j: (i, j))
    # Alpha depends only on the row tile; lane axis is innermost, so Pallas
    # only re-DMAs this tiny block when the row tile actually changes.
    alpha_spec = pl.BlockSpec((tile_rows, 2), lambda i, j: (i, 0))

    bytes_accessed = 4 * rows_pad * lanes_pad * 4       # 2 in + 2 out planes
    flops = 4 * rows_pad * lanes_pad                    # cmp + mul per elem/plane

    out_re, out_im = pl.pallas_call(
        _cprelu_kernel,
        out_shape=(out_sds, out_sds),
        grid_spec=pltpu.PrefetchScalarGridSpec(
            num_scalar_prefetch=0,
            grid=grid,
            in_specs=[alpha_spec, plane_spec, plane_spec],
            out_specs=[plane_spec, plane_spec],
        ),
        compiler_params=pltpu.CompilerParams(
            dimension_semantics=("parallel", "parallel"),
            vmem_limit_bytes=_VMEM_LIMIT,
        ),
        cost_estimate=pl.CostEstimate(
            flops=flops, transcendentals=0, bytes_accessed=bytes_accessed),
    )(alpha_rows, re2, im2)

    if rows_pad != n_rows or lanes_pad != lanes:
        out_re = out_re[:n_rows, :lanes]
        out_im = out_im[:n_rows, :lanes]
    return out_re, out_im


def cprelu_planar(re, im, alpha_re, alpha_im):
    """PReLU applied independently to the real/imag planes (planar entry point).

    Preferred when the surrounding model already holds planar f32 data; avoids
    any complex<->float conversion around the kernel.
    """
    re = jnp.asarray(re, jnp.float32)
    im = jnp.asarray(im, jnp.float32)
    assert re.shape == im.shape
    alpha_re = jnp.asarray(alpha_re, jnp.float32).reshape(-1)
    alpha_im = jnp.asarray(alpha_im, jnp.float32).reshape(-1)
    num_channels = int(alpha_re.shape[0])
    shape = re.shape
    n = re.size

    if num_channels == 1:
        a_re_s = alpha_re[0]
        a_im_s = alpha_im[0]
        if n < _MIN_PALLAS_ELEMS:
            return (jnp.where(re >= 0, re, a_re_s * re),
                    jnp.where(im >= 0, im, a_im_s * im))
        # Shared alpha: flatten into lane-dense (rows, 512) slabs.
        lanes = 4 * _LANE
        n_rows = _round_up(-(-n // lanes), _SUBLANE)
        flat_pad = n_rows * lanes - n
        re2 = jnp.pad(re.reshape(-1), (0, flat_pad)).reshape(n_rows, lanes)
        im2 = jnp.pad(im.reshape(-1), (0, flat_pad)).reshape(n_rows, lanes)
        alpha_rows = jnp.broadcast_to(jnp.stack([a_re_s, a_im_s]), (n_rows, 2))
        out_re, out_im = _cprelu_planar_pallas_2d(re2, im2, alpha_rows, n_rows, lanes)
        out_re = out_re.reshape(-1)[:n].reshape(shape)
        out_im = out_im.reshape(-1)[:n].reshape(shape)
        return out_re, out_im

    # Per-channel alpha: channel dim is axis 1 (PyTorch PReLU convention).
    assert re.ndim >= 2 and shape[1] == num_channels, (
        "per-channel alpha expects the channel dim at axis 1")
    batch = shape[0]
    n_rows = batch * num_channels
    lanes = n // n_rows                       # flattened spatial extent per row

    if lanes < _LANE or n < _MIN_PALLAS_ELEMS:
        # Tiny spatial extent: the fused XLA elementwise op wins; dispatch to it.
        bshape = [1] * re.ndim
        bshape[1] = num_channels
        a_re_b = alpha_re.reshape(bshape)
        a_im_b = alpha_im.reshape(bshape)
        return (jnp.where(re >= 0, re, a_re_b * re),
                jnp.where(im >= 0, im, a_im_b * im))

    alpha_rows = jnp.tile(jnp.stack([alpha_re, alpha_im], axis=-1), (batch, 1))
    re2 = re.reshape(n_rows, lanes)
    im2 = im.reshape(n_rows, lanes)
    out_re, out_im = _cprelu_planar_pallas_2d(re2, im2, alpha_rows, n_rows, lanes)
    return out_re.reshape(shape), out_im.reshape(shape)


def cprelu_pallas(x, alpha_re, alpha_im):
    """CPReLU forward on a complex tensor (matches the PyTorch module)."""
    x = jnp.asarray(x)
    assert jnp.issubdtype(x.dtype, jnp.complexfloating)
    x = x.astype(jnp.complex64)
    # TODO(synk): XLA has no zero-copy complex64<->f32 bitcast, so this planar
    # split/merge is the unavoidable boundary cost for complex I/O; models that
    # already carry planar data should call cprelu_planar directly.
    out_re, out_im = cprelu_planar(jnp.real(x), jnp.imag(x), alpha_re, alpha_im)
    return jax.lax.complex(out_re, out_im).astype(jnp.complex64)


def _cprelu_ref(x, alpha_re, alpha_im):
    """Plain-JAX reference (matches torch CPReLU forward)."""
    c = alpha_re.shape[0]
    if c == 1:
        a_re = alpha_re.reshape(())
        a_im = alpha_im.reshape(())
    else:
        bshape = [1] * x.ndim
        bshape[1] = c
        a_re = alpha_re.reshape(bshape)
        a_im = alpha_im.reshape(bshape)
    re, im = jnp.real(x), jnp.imag(x)
    out_re = jnp.where(re >= 0, re, a_re * re)
    out_im = jnp.where(im >= 0, im, a_im * im)
    return jax.lax.complex(out_re, out_im).astype(jnp.complex64)


class CPReLU:
    """JAX/Pallas mirror of the PyTorch CPReLU module."""

    def __init__(self, num_channels=1):
        self.num_channels = num_channels
        # PyTorch nn.PReLU default init: alpha = 0.25 per parameter.
        self.alpha_re = jnp.full((num_channels,), 0.25, jnp.float32)
        self.alpha_im = jnp.full((num_channels,), 0.25, jnp.float32)

    def __call__(self, x):
        return cprelu_pallas(x, self.alpha_re, self.alpha_im)


if __name__ == "__main__":
    key = jax.random.PRNGKey(0)
    ks = jax.random.split(key, 8)

    # 1) Per-channel alphas; x: (batch=2, channels=4, 16, 16) complex64.
    B, C, H, W = 2, 4, 16, 16
    x = (jax.random.normal(ks[0], (B, C, H, W), jnp.float32)
         + 1j * jax.random.normal(ks[1], (B, C, H, W), jnp.float32)).astype(jnp.complex64)
    alpha_re = 0.25 + 0.1 * jax.random.normal(ks[2], (C,), jnp.float32)
    alpha_im = 0.25 + 0.1 * jax.random.normal(ks[3], (C,), jnp.float32)
    out = jax.block_until_ready(jax.jit(cprelu_pallas)(x, alpha_re, alpha_im))
    ref = _cprelu_ref(x, alpha_re, alpha_im)
    assert out.shape == x.shape and out.dtype == jnp.complex64
    assert jnp.allclose(out, ref, atol=1e-6, rtol=1e-6)

    # 2) Default module (num_channels=1, shared alpha per plane): flat-slab path.
    mod = CPReLU(num_channels=1)
    x2 = (jax.random.normal(ks[4], (8, 1024), jnp.float32)
          + 1j * jax.random.normal(ks[5], (8, 1024), jnp.float32)).astype(jnp.complex64)
    out2 = jax.block_until_ready(jax.jit(mod.__call__)(x2))
    ref2 = _cprelu_ref(x2, mod.alpha_re, mod.alpha_im)
    assert jnp.allclose(out2, ref2, atol=1e-6, rtol=1e-6)

    # 3) Odd spatial extent (exercises the row / lane padding path).
    C3 = 3
    x3 = (jax.random.normal(ks[6], (2, C3, 10, 13), jnp.float32)
          + 1j * jax.random.normal(ks[7], (2, C3, 10, 13), jnp.float32)).astype(jnp.complex64)
    a3_re = 0.2 * jnp.arange(1, C3 + 1, dtype=jnp.float32)
    a3_im = 0.1 * jnp.arange(1, C3 + 1, dtype=jnp.float32)
    out3 = jax.block_until_ready(jax.jit(cprelu_pallas)(x3, a3_re, a3_im))
    ref3 = _cprelu_ref(x3, a3_re, a3_im)
    assert jnp.allclose(out3, ref3, atol=1e-6, rtol=1e-6)

    print("KERNEL_OK")
</pallas_src>

<mosaic_0001>
module attributes {stable_mosaic.version = 11 : i64} {
  func.func @_cprelu_kernel(%arg0: i32, %arg1: i32, %arg2: memref<8x2xf32, #tpu.memory_space<vmem>>, %arg3: memref<8x256xf32, #tpu.memory_space<vmem>>, %arg4: memref<8x256xf32, #tpu.memory_space<vmem>>, %arg5: memref<8x256xf32, #tpu.memory_space<vmem>>, %arg6: memref<8x256xf32, #tpu.memory_space<vmem>>) attributes {dimension_semantics = [#tpu.dimension_semantics<parallel>, #tpu.dimension_semantics<parallel>], iteration_bounds = array<i64: 1, 1>, scalar_prefetch = 0 : i64, scratch_operands = 0 : i64, tpu.core_type = #tpu.core_type<tc>, window_params = [{transform_indices = @transform_0, window_bounds = array<i64: 8, 2>}, {transform_indices = @transform_1, window_bounds = array<i64: 8, 256>}, {transform_indices = @transform_2, window_bounds = array<i64: 8, 256>}, {transform_indices = @transform_3, window_bounds = array<i64: 8, 256>}, {transform_indices = @transform_4, window_bounds = array<i64: 8, 256>}]} {
    %c0 = arith.constant 0 : index
    %c0_0 = arith.constant 0 : index
    %0 = vector.load %arg2[%c0, %c0_0] : memref<8x2xf32, #tpu.memory_space<vmem>>, vector<8x2xf32>
    %1 = vector.extract_strided_slice %0 {offsets = [0, 0], sizes = [8, 1], strides = [1, 1]} : vector<8x2xf32> to vector<8x1xf32>
    %2 = vector.extract_strided_slice %0 {offsets = [0, 1], sizes = [8, 1], strides = [1, 1]} : vector<8x2xf32> to vector<8x1xf32>
    %c0_1 = arith.constant 0 : index
    %c0_2 = arith.constant 0 : index
    %3 = vector.load %arg3[%c0_1, %c0_2] : memref<8x256xf32, #tpu.memory_space<vmem>>, vector<8x256xf32>
    %c0_3 = arith.constant 0 : index
    %c0_4 = arith.constant 0 : index
    %4 = vector.load %arg4[%c0_3, %c0_4] : memref<8x256xf32, #tpu.memory_space<vmem>>, vector<8x256xf32>
    %cst = arith.constant 0.000000e+00 : f32
    %5 = vector.broadcast %cst : f32 to vector<8x256xf32>
    %6 = arith.cmpf oge, %3, %5 : vector<8x256xf32>
    %7 = vector.broadcast %1 : vector<8x1xf32> to vector<8x256xf32>
    %8 = arith.mulf %7, %3 : vector<8x256xf32>
    %9 = arith.select %6, %3, %8 : vector<8x256xi1>, vector<8x256xf32>
    %c0_5 = arith.constant 0 : index
    %c0_6 = arith.constant 0 : index
    %10 = vector.load %arg5[%c0_5, %c0_6] : memref<8x256xf32, #tpu.memory_space<vmem>>, vector<8x256xf32>
    tpu.vector_store %arg5[%c0_5, %c0_6], %9 {strides = array<i32>} : memref<8x256xf32, #tpu.memory_space<vmem>>, vector<8x256xf32>,
    %cst_7 = arith.constant 0.000000e+00 : f32
    %11 = vector.broadcast %cst_7 : f32 to vector<8x256xf32>
    %12 = arith.cmpf oge, %4, %11 : vector<8x256xf32>
    %13 = vector.broadcast %2 : vector<8x1xf32> to vector<8x256xf32>
    %14 = arith.mulf %13, %4 : vector<8x256xf32>
    %15 = arith.select %12, %4, %14 : vector<8x256xi1>, vector<8x256xf32>
    %c0_8 = arith.constant 0 : index
    %c0_9 = arith.constant 0 : index
    %16 = vector.load %arg6[%c0_8, %c0_9] : memref<8x256xf32, #tpu.memory_space<vmem>>, vector<8x256xf32>
    tpu.vector_store %arg6[%c0_8, %c0_9], %15 {strides = array<i32>} : memref<8x256xf32, #tpu.memory_space<vmem>>, vector<8x256xf32>,
    return
  }
  func.func @transform_0(%arg0: i32, %arg1: i32) -> (i32, i32) {
    %c0_i32 = arith.constant 0 : i32
    %c0_i32_0 = arith.constant 0 : i32
    return %arg0, %c0_i32 : i32, i32
  }
  func.func @transform_1(%arg0: i32, %arg1: i32) -> (i32, i32) {
    %c0_i32 = arith.constant 0 : i32
    return %arg0, %arg1 : i32, i32
  }
  func.func @transform_2(%arg0: i32, %arg1: i32) -> (i32, i32) {
    %c0_i32 = arith.constant 0 : i32
    return %arg0, %arg1 : i32, i32
  }
  func.func @transform_3(%arg0: i32, %arg1: i32) -> (i32, i32) {
    %c0_i32 = arith.constant 0 : i32
    return %arg0, %arg1 : i32, i32
  }
  func.func @transform_4(%arg0: i32, %arg1: i32) -> (i32, i32) {
    %c0_i32 = arith.constant 0 : i32
    return %arg0, %arg1 : i32, i32
  }
}

</mosaic_0001>

<llo_original>
// kernel: custom-call.1
$region0: #{custom-call.1}
  %s0 = inlined_call_operand.hbm [shape: c64[2,4,16,16], index: 0, kind: input, shape index: {}]
  %s1 = inlined_call_operand.vmem [shape: f32[2,4,16,16], index: 1, kind: output, shape index: {}]
  %s2 = scalar_lea.hbm %s0, 2048
  $region1: #{custom-call.1} parent=0
    #allocation0 [shape = 's32[1]{0}', space=sflag, size = 0x4, scoped, tag = 'scoped memory for custom-call.1']
    %3 = vsyncpa [#allocation0], 0
    %s4 = sshll.u32 %s1, 4
    %s5 = int_to_ptr.vmem [resolvable:$true] %s4
    %7 = dma.hbm_to_vmem [thread:$0]  %s2, 2048, %s5, [#allocation0]
    %8 = dma.done [#allocation0], 2048
    %9 = vsyncpa [#allocation0], 1

// kernel: custom-call
$region0: #{custom-call}
  %s0 = inlined_call_operand.hbm [shape: c64[2,4,16,16], index: 0, kind: input, shape index: {}]
  %s1 = inlined_call_operand.vmem [shape: f32[2,4,16,16], index: 1, kind: output, shape index: {}]
  $region1: #{custom-call} parent=0
    #allocation0 [shape = 's32[1]{0}', space=sflag, size = 0x4, scoped, tag = 'scoped memory for custom-call']
    %2 = vsyncpa [#allocation0], 0
    %s3 = sshll.u32 %s1, 4
    %s4 = int_to_ptr.vmem [resolvable:$true] %s3
    %6 = dma.hbm_to_vmem [thread:$0]  %s0, 2048, %s4, [#allocation0]
    %7 = dma.done [#allocation0], 2048
    %8 = vsyncpa [#allocation0], 1

// kernel: custom-call.2
$region0: #{custom-call.2}
  %s0 = inlined_call_operand.vmem [shape: f32[2,4,16,16], index: 0, kind: input, shape index: {}]
  %s1 = inlined_call_operand.vmem [shape: f32[2,4,16,16], index: 1, kind: input, shape index: {}]
  %s2 = inlined_call_operand.hbm [shape: c64[2,4,16,16], index: 2, kind: output, shape index: {}]
  %s3 = scalar_lea.hbm %s2, 2048
  $region1: #{custom-call.2} parent=0
    #allocation0 [shape = 's32[1]{0}', space=sflag, size = 0x4, scoped, tag = 'scoped memory for custom-call.2']
    %4 = vsyncpa [#allocation0], 0
    %s5 = sshll.u32 %s0, 4
    %s6 = int_to_ptr.vmem [resolvable:$true] %s5
    %8 = dma.vmem_to_hbm [thread:$0]  %s6, 2048, %s2, [#allocation0]
    %9 = dma.done [#allocation0], 2048
    %10 = vsyncpa [#allocation0], 1
  $region2: #{custom-call.2} parent=0
    #allocation1 [shape = 's32[1]{0}', space=sflag, size = 0x4, scoped, tag = 'scoped memory for custom-call.2']
    %11 = vsyncpa [#allocation1], 0
    %s12 = sshll.u32 %s1, 4
    %s13 = int_to_ptr.vmem [resolvable:$true] %s12
    %15 = dma.vmem_to_hbm [thread:$0]  %s13, 2048, %s3, [#allocation1]
    %16 = dma.done [#allocation1], 2048
    %17 = vsyncpa [#allocation1], 1

// kernel: cprelu_pallas.1
$region0: #{cprelu_pallas.1}
  #allocation0 [shape = 'u32[]', space=smem, size = 0x4, offset = 0x4, fixed_abs, tag = 'smem constant byte address 0x4 - core index']
  #allocation1 [shape = 'u32[144,128]{1,0:T(1,128)}', space=vmem, size = 0x12000, scoped, tag = 'internal scratch']
  %s0 = inlined_call_operand.vmem [shape: f32[8,2], index: 0, kind: input, shape index: {}]
  %s1 = inlined_call_operand.vmem [shape: f32[8,256], index: 1, kind: input, shape index: {}]
  %s2 = inlined_call_operand.vmem [shape: f32[8,256], index: 2, kind: input, shape index: {}]
  %s3 = inlined_call_operand.vmem [shape: f32[8,256], index: 3, kind: output, shape index: {0}]
  %s4 = inlined_call_operand.vmem [shape: f32[8,256], index: 4, kind: output, shape index: {1}]
  %5 = xla_tuple %s3, %s4
  %s6 = sld [smem:[#allocation0]]
  $region30: #{cprelu_pallas.1} parent=0
    _
  %s8 = ssub.s32 1, %s6
  %s9 = scalar_select 0, %s8, %s6
  // Predicated region
  $region2: #{cprelu_pallas.1} parent=0 // pred_check
    _
  $region3: #{cprelu_pallas.1} parent=0 // pred_check_branch
    %11 = sbr.rel (0) target = $region5
  $region4: #{cprelu_pallas.1} parent=0 // pred_region
    _
  $region5: #{cprelu_pallas.1} parent=0 // pred_fallthru
    _
  // Predicated region
  $region6: #{cprelu_pallas.1} parent=0 // pred_check
    _
  $region7: #{cprelu_pallas.1} parent=0 // pred_check_branch
    %13 = sbr.rel (0) target = $region9
  $region8: #{cprelu_pallas.1} parent=0 // pred_region
    _
  $region9: #{cprelu_pallas.1} parent=0 // pred_fallthru
    _
  // Predicated region
  $region10: #{cprelu_pallas.1} parent=0 // pred_check
    _
  $region11: #{cprelu_pallas.1} parent=0 // pred_check_branch
    %15 = sbr.rel (0) target = $region13
  $region12: #{cprelu_pallas.1} parent=0 // pred_region
    _
  $region13: #{cprelu_pallas.1} parent=0 // pred_fallthru
    _
  %v16 = vld [vmem:[%s0] sm:$0xff]
  %v17 = vld [vmem:[%s1] sm:$0xff]
  %v18 = vld [vmem:[%s1 + $0x8] sm:$0xff]
  %v19 = vld [vmem:[%s2] sm:$0xff]
  %v20 = vld [vmem:[%s2 + $0x8] sm:$0xff]
  %vm21 = vcmp.ge.f32.partialorder %v17, 0.0
  %vm22 = vcmp.ge.f32.partialorder %v18, 0.0
  %24 = vset.pattern.permute.xlu0 0
  %25 = vperm.xlu0 %24, %v16
  %v26 = vpop.permute.xlu0 %25
  %v28 = vmul.f32 %v26, %v17
  %v29 = vmul.f32 %v26, %v18
  %v30 = vsel %vm21, %v17, %v28
  %v31 = vsel %vm22, %v18, %v29
  %32 = vst [vmem:[%s3] sm:$0xff] %v30
  %33 = vst [vmem:[%s3 + $0x8] sm:$0xff] %v31
  %vm34 = vcmp.ge.f32.partialorder %v19, 0.0
  %vm35 = vcmp.ge.f32.partialorder %v20, 0.0
  %36 = vset.pattern.permute.xlu0 1
  %37 = vperm.xlu0 %36, %v16
  %v38 = vpop.permute.xlu0 %37
  %v40 = vmul.f32 %v38, %v19
  %v41 = vmul.f32 %v38, %v20
  %v42 = vsel %vm34, %v19, %v40
  %v43 = vsel %vm35, %v20, %v41
  %44 = vst [vmem:[%s4] sm:$0xff] %v42
  %45 = vst [vmem:[%s4 + $0x8] sm:$0xff] %v43
  // Predicated region
  $region14: #{cprelu_pallas.1} parent=0 // pred_check
    _
  $region15: #{cprelu_pallas.1} parent=0 // pred_check_branch
    %47 = sbr.rel (0) target = $region17
  $region16: #{cprelu_pallas.1} parent=0 // pred_region
    _
  $region17: #{cprelu_pallas.1} parent=0 // pred_fallthru
    _
  // Predicated region
  $region18: #{cprelu_pallas.1} parent=0 // pred_check
    _
  $region19: #{cprelu_pallas.1} parent=0 // pred_check_branch
    %49 = sbr.rel (0) target = $region21
  $region20: #{cprelu_pallas.1} parent=0 // pred_region
    _
  $region21: #{cprelu_pallas.1} parent=0 // pred_fallthru
    _
  // Predicated region
  $region22: #{cprelu_pallas.1} parent=0 // pred_check
    _
  $region23: #{cprelu_pallas.1} parent=0 // pred_check_branch
    %51 = sbr.rel (0) target = $region25
  $region24: #{cprelu_pallas.1} parent=0 // pred_region
    _
  $region25: #{cprelu_pallas.1} parent=0 // pred_fallthru
    _
  // Predicated region
  $region26: #{cprelu_pallas.1} parent=0 // pred_check
    _
  $region27: #{cprelu_pallas.1} parent=0 // pred_check_branch
    %53 = sbr.rel (0) target = $region29
  $region28: #{cprelu_pallas.1} parent=0 // pred_region
    _
  $region29: #{cprelu_pallas.1} parent=0 // pred_fallthru
    _

</llo_original>
